<compile_context>
chip_gen: v5e
topology: v5e:2x2
jax: 0.10.0
libtpu: 0.0.40
codegen_flags: <defaults>
</compile_context>

<pallas_src>
import functools

import jax
import jax.numpy as jnp
from jax.experimental import pallas as pl
from jax.experimental.pallas import tpu as pltpu


TILE_M_DEFAULT = 256   # token tile (multiple of 8; 256 is MXU-friendly)
TILE_F_DEFAULT = 512   # ffn tile used only when weights do not fit VMEM


def _round_up(x, m):
    return ((x + m - 1) // m) * m


def _vmem_capacity_bytes():
    """Physical VMEM per core; conservative (v7x-sized) fallback."""
    try:
        cap = int(pltpu.get_tpu_info().vmem_capacity_bytes)
        if cap > 0:
            return cap
    except Exception:
        pass
    return 64 * 1024 * 1024


# ---------------------------------------------------------------------------
# Kernels
# ---------------------------------------------------------------------------
def ffn_kernel_resident(x_ref, w1_ref, b1_ref, w2_ref, b2_ref, o_ref):
    """Full-F-resident path: weights stay in VMEM across all M tiles."""
    w1 = w1_ref[...]
    h = jnp.dot(x_ref[...].astype(w1.dtype), w1,
                preferred_element_type=jnp.float32)
    h = jnp.maximum(h + b1_ref[...], 0.0)
    # TODO(synk): activation_dropout / dropout / quant_noise are identity in
    # eval mode (p == 0) and are intentionally omitted.
    w2 = w2_ref[...]
    y = jnp.dot(h.astype(w2.dtype), w2, preferred_element_type=jnp.float32)
    o_ref[...] = (y + b2_ref[...]).astype(o_ref.dtype)


def ffn_kernel_ftiled(x_ref, w1_ref, b1_ref, w2_ref, b2_ref, o_ref, acc_ref):
    """F-tiled path: one (tile_m, tile_f) slice; fc2 partials accumulated."""
    j = pl.program_id(1)

    w1 = w1_ref[...]
    h = jnp.dot(x_ref[...].astype(w1.dtype), w1,
                preferred_element_type=jnp.float32)
    h = jnp.maximum(h + b1_ref[...], 0.0)
    w2 = w2_ref[...]
    partial = jnp.dot(h.astype(w2.dtype), w2,
                      preferred_element_type=jnp.float32)

    @pl.when(j == 0)
    def _():
        acc_ref[...] = partial          # no separate memset

    @pl.when(j > 0)
    def _():
        acc_ref[...] += partial

    @pl.when(j == pl.num_programs(1) - 1)
    def _():
        o_ref[...] = (acc_ref[...] + b2_ref[...]).astype(o_ref.dtype)


# ---------------------------------------------------------------------------
# One-time parameter preparation
# ---------------------------------------------------------------------------
def prepare_ffn_params(w1, b1, w2, b2, *, dtype=jnp.bfloat16,
                       tile_m_hint=TILE_M_DEFAULT, tile_f=TILE_F_DEFAULT):
    """Do this once at load time, NOT per forward call.

    w1: (ffn_dim, embed_dim), b1: (ffn_dim,)   -- PyTorch nn.Linear layout
    w2: (embed_dim, ffn_dim), b2: (embed_dim,)

    Transposes weights to (in, out), zero-pads lane dims to 128 (F to 256),
    stores them in bf16 by default, and decides whether the full FFN dim can
    stay VMEM-resident on this TPU generation.
    """
    w1 = jnp.asarray(w1)
    w2 = jnp.asarray(w2)
    ffn_dim, embed_dim = w1.shape

    d_pad = _round_up(embed_dim, 128)
    f_aligned = _round_up(ffn_dim, 256)

    w_bytes = jnp.dtype(dtype).itemsize
    budget = int(_vmem_capacity_bytes() * 3 // 4)   # headroom for compiler scratch

    def working_set(tf):
        # Double-buffered x/out/weight blocks + f32 intermediates/accumulator.
        return (2 * 2 * d_pad * tf * w_bytes          # W1 + W2 blocks
                + 2 * tile_m_hint * d_pad * 4         # x tiles (f32 activations)
                + 2 * tile_m_hint * d_pad * 4         # out tiles
                + tile_m_hint * tf * 4                # h intermediate (f32)
                + tile_m_hint * d_pad * 4             # fc2 accumulator (f32)
                + 2 * (tf + d_pad) * 4)               # biases

    if working_set(f_aligned) <= budget:
        tile_f_sel = f_aligned                        # full-F resident
    else:
        tile_f_sel = min(_round_up(tile_f, 256), f_aligned)
        while tile_f_sel > 256 and working_set(tile_f_sel) > budget:
            tile_f_sel -= 256
    f_pad = _round_up(f_aligned, tile_f_sel)

    # TODO(synk): optional fp8 weight path for v7x inference (extra ~2x MXU).
    w1_t = jnp.zeros((d_pad, f_pad), dtype).at[:embed_dim, :ffn_dim].set(
        w1.astype(dtype).T)
    w2_t = jnp.zeros((f_pad, d_pad), dtype).at[:ffn_dim, :embed_dim].set(
        w2.astype(dtype).T)
    b1_p = jnp.zeros((1, f_pad), jnp.float32).at[0, :ffn_dim].set(
        jnp.asarray(b1).astype(jnp.float32))
    b2_p = jnp.zeros((1, d_pad), jnp.float32).at[0, :embed_dim].set(
        jnp.asarray(b2).astype(jnp.float32))

    return dict(w1_t=w1_t, b1=b1_p, w2_t=w2_t, b2=b2_p,
                embed_dim=int(embed_dim), ffn_dim=int(ffn_dim),
                tile_f=int(tile_f_sel))


# ---------------------------------------------------------------------------
# Forward
# ---------------------------------------------------------------------------
def ffn_forward(x, params, *, tile_m=TILE_M_DEFAULT):
    """x: (..., embed_dim)  (fairseq uses T x B x C).  Returns same shape."""
    return _ffn_forward(
        x, params["w1_t"], params["b1"], params["w2_t"], params["b2"],
        embed_dim=int(params["embed_dim"]),
        tile_f=int(params["tile_f"]),
        tile_m=int(tile_m))


@functools.partial(jax.jit, static_argnames=("embed_dim", "tile_f", "tile_m"))
def _ffn_forward(x, w1_t, b1_p, w2_t, b2_p, *, embed_dim, tile_f, tile_m):
    d_pad, f_pad = w1_t.shape
    x_shape = x.shape
    x2d = x.reshape(-1, x_shape[-1])
    M = x2d.shape[0]

    # Zero-pad the contraction (lane) axis only when required for correctness;
    # ragged M is handled by Pallas's masked partial last block (no copy).
    if d_pad != embed_dim:
        x2d = jnp.pad(x2d, ((0, 0), (0, d_pad - embed_dim)))

    # Token tiling: clamp to problem size, keep a multiple of 8, and ensure
    # at least two M tiles so the "parallel" axis spans both v7x TensorCores.
    tile_m = max(8, min(_round_up(tile_m, 8), _round_up(M, 8)))
    if pl.cdiv(M, tile_m) < 2 and M > 8:
        tile_m = _round_up(pl.cdiv(M, 2), 8)
    grid_m = pl.cdiv(M, tile_m)
    grid_f = f_pad // tile_f

    act_bytes = jnp.dtype(x2d.dtype).itemsize
    w_bytes = jnp.dtype(w1_t.dtype).itemsize
    out_bytes = jnp.dtype(x.dtype).itemsize

    # VMEM budget for this configuration (+ headroom), capped below physical.
    need = (2 * tile_m * d_pad * act_bytes
            + 2 * d_pad * tile_f * w_bytes
            + 2 * tile_f * d_pad * w_bytes
            + 2 * tile_m * d_pad * out_bytes
            + tile_m * tile_f * 4
            + tile_m * d_pad * 4
            + 2 * (tile_f + d_pad) * 4)
    cap = _vmem_capacity_bytes()
    vmem_limit = int(min(max(need + (8 << 20), 32 << 20), cap - (8 << 20)))
    # TODO(synk): if `need` still exceeds the physical cap (e.g. f32 weights at
    # very large embed_dim) tiles should be shrunk further instead of clamped.

    m_eff = grid_m * tile_m
    weight_bytes = (w1_t.size + w2_t.size) * w_bytes
    cost = pl.CostEstimate(
        flops=4 * m_eff * d_pad * f_pad,                 # two matmuls
        transcendentals=0,
        bytes_accessed=int(m_eff * d_pad * act_bytes     # read x
                           + m_eff * d_pad * out_bytes   # write out
                           + weight_bytes * (1 if grid_f == 1 else grid_m)
                           + (f_pad + d_pad) * 4))       # biases

    out_shape = jax.ShapeDtypeStruct((M, d_pad), x.dtype)

    if grid_f == 1:
        # Weights resident: constant index maps -> W1/W2 DMA'd from HBM once
        # and reused across every M tile.
        out_p = pl.pallas_call(
            ffn_kernel_resident,
            out_shape=out_shape,
            grid_spec=pltpu.PrefetchScalarGridSpec(
                num_scalar_prefetch=0,
                grid=(grid_m,),
                in_specs=[
                    pl.BlockSpec((tile_m, d_pad), lambda i: (i, 0)),   # x tile
                    pl.BlockSpec((d_pad, f_pad), lambda i: (0, 0)),    # W1 (resident)
                    pl.BlockSpec((1, f_pad), lambda i: (0, 0)),        # b1
                    pl.BlockSpec((f_pad, d_pad), lambda i: (0, 0)),    # W2 (resident)
                    pl.BlockSpec((1, d_pad), lambda i: (0, 0)),        # b2
                ],
                out_specs=pl.BlockSpec((tile_m, d_pad), lambda i: (i, 0)),
            ),
            compiler_params=pltpu.CompilerParams(
                dimension_semantics=("parallel",),
                vmem_limit_bytes=vmem_limit),
            cost_estimate=cost,
        )(x2d, w1_t, b1_p, w2_t, b2_p)
    else:
        out_p = pl.pallas_call(
            ffn_kernel_ftiled,
            out_shape=out_shape,
            grid_spec=pltpu.PrefetchScalarGridSpec(
                num_scalar_prefetch=0,
                grid=(grid_m, grid_f),
                in_specs=[
                    pl.BlockSpec((tile_m, d_pad), lambda i, j: (i, 0)),  # x tile
                    pl.BlockSpec((d_pad, tile_f), lambda i, j: (0, j)),  # W1 cols
                    pl.BlockSpec((1, tile_f), lambda i, j: (0, j)),      # b1 slice
                    pl.BlockSpec((tile_f, d_pad), lambda i, j: (j, 0)),  # W2 rows
                    pl.BlockSpec((1, d_pad), lambda i, j: (0, 0)),       # b2
                ],
                out_specs=pl.BlockSpec((tile_m, d_pad), lambda i, j: (i, 0)),
                scratch_shapes=[pltpu.VMEM((tile_m, d_pad), jnp.float32)],
            ),
            compiler_params=pltpu.CompilerParams(
                dimension_semantics=("parallel", "arbitrary"),
                vmem_limit_bytes=vmem_limit),
            cost_estimate=cost,
        )(x2d, w1_t, b1_p, w2_t, b2_p)

    if d_pad != embed_dim:
        out_p = out_p[:, :embed_dim]
    return out_p.reshape(x_shape)


if __name__ == "__main__":
    # Small shapes consistent with the module: T x B x C input.
    seq, batch = 8, 2
    embed_dim, ffn_dim = 32, 64

    key = jax.random.PRNGKey(0)
    kx, kw1, kb1, kw2, kb2 = jax.random.split(key, 5)

    x = jax.random.normal(kx, (seq, batch, embed_dim), dtype=jnp.float32)
    # nn.Linear(embed_dim, ffn_dim): weight (ffn_dim, embed_dim), bias (ffn_dim,)
    w1 = jax.random.normal(kw1, (ffn_dim, embed_dim), dtype=jnp.float32) * 0.05
    b1 = jax.random.normal(kb1, (ffn_dim,), dtype=jnp.float32) * 0.05
    # nn.Linear(ffn_dim, embed_dim): weight (embed_dim, ffn_dim), bias (embed_dim,)
    w2 = jax.random.normal(kw2, (embed_dim, ffn_dim), dtype=jnp.float32) * 0.05
    b2 = jax.random.normal(kb2, (embed_dim,), dtype=jnp.float32) * 0.05

    # One-time parameter prep (transpose + pad + bf16); per-call work is x-only.
    params = prepare_ffn_params(w1, b1, w2, b2)

    out = ffn_forward(x, params)
    out = jax.block_until_ready(out)

    # Pure-JAX f32 reference.  Kernel runs bf16 matmuls with f32 accumulation,
    # so tolerance is bf16-level rather than 1e-5.
    x2d = x.reshape(-1, embed_dim)
    ref = (jnp.maximum(x2d @ w1.T + b1, 0.0) @ w2.T + b2).reshape(x.shape)
    assert out.shape == x.shape
    err = float(jnp.max(jnp.abs(out - ref)))
    assert jnp.allclose(out, ref, atol=2e-2, rtol=2e-2), (
        f"mismatch vs reference: max abs err = {err}")

    print("KERNEL_OK")
</pallas_src>

<mosaic_0001>
module attributes {stable_mosaic.version = 11 : i64} {
  func.func @ffn_kernel_resident(%arg0: i32, %arg1: memref<8x128xf32, #tpu.memory_space<vmem>>, %arg2: memref<128x256xbf16, #tpu.memory_space<vmem>>, %arg3: memref<1x256xf32, #tpu.memory_space<vmem>>, %arg4: memref<256x128xbf16, #tpu.memory_space<vmem>>, %arg5: memref<1x128xf32, #tpu.memory_space<vmem>>, %arg6: memref<8x128xf32, #tpu.memory_space<vmem>>) attributes {dimension_semantics = [#tpu.dimension_semantics<parallel>], iteration_bounds = array<i64: 2>, scalar_prefetch = 0 : i64, scratch_operands = 0 : i64, tpu.core_type = #tpu.core_type<tc>, window_params = [{transform_indices = @transform_0, window_bounds = array<i64: 8, 128>}, {pipeline_mode = #tpu.pipeline_mode<synchronous>, transform_indices = @transform_1, window_bounds = array<i64: 128, 256>}, {pipeline_mode = #tpu.pipeline_mode<synchronous>, transform_indices = @transform_2, window_bounds = array<i64: 1, 256>}, {pipeline_mode = #tpu.pipeline_mode<synchronous>, transform_indices = @transform_3, window_bounds = array<i64: 256, 128>}, {pipeline_mode = #tpu.pipeline_mode<synchronous>, transform_indices = @transform_4, window_bounds = array<i64: 1, 128>}, {transform_indices = @transform_5, window_bounds = array<i64: 8, 128>}]} {
    %c0 = arith.constant 0 : index
    %c0_0 = arith.constant 0 : index
    %0 = vector.load %arg2[%c0, %c0_0] : memref<128x256xbf16, #tpu.memory_space<vmem>>, vector<128x256xbf16>
    %c0_1 = arith.constant 0 : index
    %c0_2 = arith.constant 0 : index
    %1 = vector.load %arg1[%c0_1, %c0_2] : memref<8x128xf32, #tpu.memory_space<vmem>>, vector<8x128xf32>
    %2 = arith.truncf %1 : vector<8x128xf32> to vector<8x128xbf16>
    %cst = arith.constant dense<0.000000e+00> : vector<8x256xf32>
    %3 = tpu.matmul %2, %0, %cst {dimension_numbers = #tpu.dot_dimension_numbers<[1], [0], [0], [1], [0, 0, 1, 1], [], []>} : vector<8x128xbf16>, vector<128x256xbf16>, vector<8x256xf32> -> vector<8x256xf32>
    %c0_3 = arith.constant 0 : index
    %c0_4 = arith.constant 0 : index
    %4 = vector.load %arg3[%c0_3, %c0_4] : memref<1x256xf32, #tpu.memory_space<vmem>>, vector<1x256xf32>
    %5 = vector.broadcast %4 : vector<1x256xf32> to vector<8x256xf32>
    %6 = arith.addf %3, %5 : vector<8x256xf32>
    %cst_5 = arith.constant 0.000000e+00 : f32
    %7 = vector.broadcast %cst_5 : f32 to vector<8x256xf32>
    %8 = arith.maximumf %6, %7 : vector<8x256xf32>
    %c0_6 = arith.constant 0 : index
    %c0_7 = arith.constant 0 : index
    %9 = vector.load %arg4[%c0_6, %c0_7] : memref<256x128xbf16, #tpu.memory_space<vmem>>, vector<256x128xbf16>
    %10 = arith.truncf %8 : vector<8x256xf32> to vector<8x256xbf16>
    %cst_8 = arith.constant dense<0.000000e+00> : vector<8x128xf32>
    %11 = tpu.matmul %10, %9, %cst_8 {dimension_numbers = #tpu.dot_dimension_numbers<[1], [0], [0], [1], [0, 0, 1, 1], [], []>} : vector<8x256xbf16>, vector<256x128xbf16>, vector<8x128xf32> -> vector<8x128xf32>
    %c0_9 = arith.constant 0 : index
    %c0_10 = arith.constant 0 : index
    %12 = vector.load %arg5[%c0_9, %c0_10] : memref<1x128xf32, #tpu.memory_space<vmem>>, vector<1x128xf32>
    %13 = vector.broadcast %12 : vector<1x128xf32> to vector<8x128xf32>
    %14 = arith.addf %11, %13 : vector<8x128xf32>
    %c0_11 = arith.constant 0 : index
    %c0_12 = arith.constant 0 : index
    %15 = vector.load %arg6[%c0_11, %c0_12] : memref<8x128xf32, #tpu.memory_space<vmem>>, vector<8x128xf32>
    tpu.vector_store %arg6[%c0_11, %c0_12], %14 {strides = array<i32>} : memref<8x128xf32, #tpu.memory_space<vmem>>, vector<8x128xf32>,
    return
  }
  func.func @transform_0(%arg0: i32) -> (i32, i32) {
    %c0_i32 = arith.constant 0 : i32
    %c0_i32_0 = arith.constant 0 : i32
    return %arg0, %c0_i32 : i32, i32
  }
  func.func @transform_1(%arg0: i32) -> (i32, i32) {
    %c0_i32 = arith.constant 0 : i32
    %c0_i32_0 = arith.constant 0 : i32
    %c0_i32_1 = arith.constant 0 : i32
    return %c0_i32, %c0_i32_0 : i32, i32
  }
  func.func @transform_2(%arg0: i32) -> (i32, i32) {
    %c0_i32 = arith.constant 0 : i32
    %c0_i32_0 = arith.constant 0 : i32
    %c0_i32_1 = arith.constant 0 : i32
    return %c0_i32, %c0_i32_0 : i32, i32
  }
  func.func @transform_3(%arg0: i32) -> (i32, i32) {
    %c0_i32 = arith.constant 0 : i32
    %c0_i32_0 = arith.constant 0 : i32
    %c0_i32_1 = arith.constant 0 : i32
    return %c0_i32, %c0_i32_0 : i32, i32
  }
  func.func @transform_4(%arg0: i32) -> (i32, i32) {
    %c0_i32 = arith.constant 0 : i32
    %c0_i32_0 = arith.constant 0 : i32
    %c0_i32_1 = arith.constant 0 : i32
    return %c0_i32, %c0_i32_0 : i32, i32
  }
  func.func @transform_5(%arg0: i32) -> (i32, i32) {
    %c0_i32 = arith.constant 0 : i32
    %c0_i32_0 = arith.constant 0 : i32
    return %arg0, %c0_i32 : i32, i32
  }
}

</mosaic_0001>

<llo_original>
// kernel: _ffn_forward.1
$region0: #{_ffn_forward.1}
  #allocation0 [shape = 'u32[]', space=smem, size = 0x4, offset = 0x4, fixed_abs, tag = 'smem constant byte address 0x4 - core index']
  #allocation1 [shape = 'u32[72,128]{1,0:T(1,128)}', space=vmem, size = 0x9000, scoped, tag = 'internal scratch']
  %s0 = inlined_call_operand.vmem [shape: f32[16,128], index: 0, kind: input, shape index: {}]
  %s1 = inlined_call_operand.hbm [shape: bf16[128,256], index: 1, kind: input, shape index: {}]
  %s2 = inlined_call_operand.vmem [shape: f32[1,256], index: 2, kind: input, shape index: {}]
  %s3 = inlined_call_operand.hbm [shape: bf16[256,128], index: 3, kind: input, shape index: {}]
  %s4 = inlined_call_operand.vmem [shape: f32[1,128], index: 4, kind: input, shape index: {}]
  %s5 = inlined_call_operand.hbm [shape: f32[16,128], index: 5, kind: output, shape index: {}]
  %s6 = sld [smem:[#allocation0]]
  $region61: #{_ffn_forward.1} parent=0
    _
  %s8 = ssub.s32 1, %s6
  %s9 = scalar_select 0, %s8, %s6
  $region1: #{_ffn_forward.1} parent=0
    #allocation2 [shape = 'u8[65536]{0}', space=vmem, size = 0x10000, scoped, tag = 'input window, operand 1, single buffered']
    #allocation3 [shape = 's32[2]{0}', space=sflag, size = 0x8, scoped, tag = 'scoped memory for _ffn_forward.1']
    #allocation4 [shape = 's32[2]{0}', space=sflag, size = 0x8, scoped, tag = 'scoped memory for _ffn_forward.1']
    #allocation5 [shape = 'u8[65536]{0}', space=vmem, size = 0x10000, scoped, tag = 'input window, operand 3, single buffered']
    #allocation6 [shape = 's32[1]{0}', space=sflag, size = 0x4, scoped, tag = 'scoped memory for _ffn_forward.1']
    #allocation7 [shape = 'u8[8192]{0}', space=vmem, size = 0x2000, scoped, tag = 'output window, operand 0']
    %10 = vsyncpa [#allocation3], 0
    %11 = vsyncpa [#allocation6], 0
    %12 = vsyncpa [#allocation4], 0
    %s13 = scalar_lea.sflag [#allocation4], 1
    %14 = vsyncpa %s13, 0
    loop: start=0, step=1, limit=4
    $region2: #{_ffn_forward.1} parent=1 // loop_pre_header
      _
    $region3: #{_ffn_forward.1} parent=1 // loop_header
      %s16 = sphi 0, %s20
      %p17 = scmp.ge.s32.totalorder %s16, 4
      %s26 = sphi 0, %s28
      %s29 = sphi 0, %s26
      %s30 = sphi 0, %s29
      %s46 = sphi 0, %s30
      %s50 = sphi 0, %s50
      %s52 = sphi 0, %s50
      %s53 = sphi 0, %s52
      %s67 = sphi 0, %s53
      %s71 = sphi 0, %s71
      %s73 = sphi 0, %s71
      %s74 = sphi 0, %s73
      %s88 = sphi 0, %s74
      %s92 = sphi 0, %s92
      %s94 = sphi 0, %s92
      %s95 = sphi 0, %s94
      %s109 = sphi 0, %s95
      %s113 = sphi 0, %s113
      %s115 = sphi 0, %s113
      %s116 = sphi 0, %s115
      %s130 = sphi 0, %s116
      %s136 = sphi 0, %s138
      %s139 = sphi 0, %s136
      %s140 = sphi 0, %s139
      %s156 = sphi 0, %s140
    $region4: #{_ffn_forward.1} parent=1 // loop_header_branch
      %19 = sbr.rel (%p17) target = $region8
    $region5: #{_ffn_forward.1} parent=1 // loop_body
      %s21 = ssub.s32 %s16, 1
      %s22 = ssub.s32 %s16, 2
      %s23 = sadd.s32 %s16, 1
      %s24 = ssub.s32 %s16, %s23
      %p25 = scmp.eq.s32.totalorder %s24, 0
      %s27 = sadd.s32 %s26, 1
      %s28 = scalar_select %p25, %s26, %s27
      %p31 = pneg %p25
      %p32 = scmp.eq.s32.totalorder %s16, 1
      %p33 = por %p31, %p32
      %p34 = scmp.ne.s32.totalorder %s26, %s29
      %p35 = scmp.eq.s32.totalorder %s16, 0
      %p36 = por %p34, %p35
      %p37 = scmp.ne.s32.totalorder %s26, %s29
      %p38 = scmp.eq.s32.totalorder %s21, 1
      %p39 = por %p37, %p38
      %p40 = scmp.ne.s32.totalorder %s29, %s30
      %p41 = scmp.eq.s32.totalorder %s21, 0
      %p42 = por %p40, %p41
      %p43 = scmp.ne.s32.totalorder %s29, %s30
      %p44 = scmp.eq.s32.totalorder %s22, 1
      %p45 = por %p43, %p44
      %p47 = scmp.ne.s32.totalorder %s30, %s46
      %p48 = scmp.eq.s32.totalorder %s22, 0
      %p49 = por %p47, %p48
      %s51 = sadd.s32 %s50, 1
      %p54 = scmp.eq.s32.totalorder %s16, 1
      %p55 = scmp.ne.s32.totalorder %s50, %s52
      %p56 = scmp.eq.s32.totalorder %s16, 0
      %p57 = por %p55, %p56
      %p58 = scmp.ne.s32.totalorder %s50, %s52
      %p59 = scmp.eq.s32.totalorder %s21, 1
      %p60 = por %p58, %p59
      %p61 = scmp.ne.s32.totalorder %s52, %s53
      %p62 = scmp.eq.s32.totalorder %s21, 0
      %p63 = por %p61, %p62
      %p64 = scmp.ne.s32.totalorder %s52, %s53
      %p65 = scmp.eq.s32.totalorder %s22, 1
      %p66 = por %p64, %p65
      %p68 = scmp.ne.s32.totalorder %s53, %s67
      %p69 = scmp.eq.s32.totalorder %s22, 0
      %p70 = por %p68, %p69
      %s72 = sadd.s32 %s71, 1
      %p75 = scmp.eq.s32.totalorder %s16, 1
      %p76 = scmp.ne.s32.totalorder %s71, %s73
      %p77 = scmp.eq.s32.totalorder %s16, 0
      %p78 = por %p76, %p77
      %p79 = scmp.ne.s32.totalorder %s71, %s73
      %p80 = scmp.eq.s32.totalorder %s21, 1
      %p81 = por %p79, %p80
      %p82 = scmp.ne.s32.totalorder %s73, %s74
      %p83 = scmp.eq.s32.totalorder %s21, 0
      %p84 = por %p82, %p83
      %p85 = scmp.ne.s32.totalorder %s73, %s74
      %p86 = scmp.eq.s32.totalorder %s22, 1
      %p87 = por %p85, %p86
      %p89 = scmp.ne.s32.totalorder %s74, %s88
      %p90 = scmp.eq.s32.totalorder %s22, 0
      %p91 = por %p89, %p90
      %s93 = sadd.s32 %s92, 1
      %p96 = scmp.eq.s32.totalorder %s16, 1
      %p97 = scmp.ne.s32.totalorder %s92, %s94
      %p98 = scmp.eq.s32.totalorder %s16, 0
      %p99 = por %p97, %p98
      %p100 = scmp.ne.s32.totalorder %s92, %s94
      %p101 = scmp.eq.s32.totalorder %s21, 1
      %p102 = por %p100, %p101
      %p103 = scmp.ne.s32.totalorder %s94, %s95
      %p104 = scmp.eq.s32.totalorder %s21, 0
      %p105 = por %p103, %p104
      %p106 = scmp.ne.s32.totalorder %s94, %s95
      %p107 = scmp.eq.s32.totalorder %s22, 1
      %p108 = por %p106, %p107
      %p110 = scmp.ne.s32.totalorder %s95, %s109
      %p111 = scmp.eq.s32.totalorder %s22, 0
      %p112 = por %p110, %p111
      %s114 = sadd.s32 %s113, 1
      %p117 = scmp.eq.s32.totalorder %s16, 1
      %p118 = scmp.ne.s32.totalorder %s113, %s115
      %p119 = scmp.eq.s32.totalorder %s16, 0
      %p120 = por %p118, %p119
      %p121 = scmp.ne.s32.totalorder %s113, %s115
      %p122 = scmp.eq.s32.totalorder %s21, 1
      %p123 = por %p121, %p122
      %p124 = scmp.ne.s32.totalorder %s115, %s116
      %p125 = scmp.eq.s32.totalorder %s21, 0
      %p126 = por %p124, %p125
      %p127 = scmp.ne.s32.totalorder %s115, %s116
      %p128 = scmp.eq.s32.totalorder %s22, 1
      %p129 = por %p127, %p128
      %p131 = scmp.ne.s32.totalorder %s116, %s130
      %p132 = scmp.eq.s32.totalorder %s22, 0
      %p133 = por %p131, %p132
      %s134 = ssub.s32 %s16, %s23
      %p135 = scmp.eq.s32.totalorder %s134, 0
      %s137 = sadd.s32 %s136, 1
      %s138 = scalar_select %p135, %s136, %s137
      %p141 = pneg %p135
      %p142 = scmp.eq.s32.totalorder %s16, 1
      %p143 = por %p141, %p142
      %p144 = scmp.ne.s32.totalorder %s136, %s139
      %p145 = scmp.eq.s32.totalorder %s16, 0
      %p146 = por %p144, %p145
      %p147 = scmp.ne.s32.totalorder %s136, %s139
      %p148 = scmp.eq.s32.totalorder %s21, 1
      %p149 = por %p147, %p148
      %p150 = scmp.ne.s32.totalorder %s139, %s140
      %p151 = scmp.eq.s32.totalorder %s21, 0
      %p152 = por %p150, %p151
      %p153 = scmp.ne.s32.totalorder %s139, %s140
      %p154 = scmp.eq.s32.totalorder %s22, 1
      %p155 = por %p153, %p154
      %p157 = scmp.ne.s32.totalorder %s140, %s156
      %p158 = scmp.eq.s32.totalorder %s22, 0
      %p159 = por %p157, %p158
      %p160 = scmp.le.s32.totalorder 1, %s16
      %p161 = scmp.lt.s32.totalorder %s16, 3
      %p162 = pnand %p160, %p161
      %p163 = pneg %p162
      // Predicated region
      $region9: #{_ffn_forward.1} parent=5 // pred_check
        _
      $region10: #{_ffn_forward.1} parent=5 // pred_check_branch
        %165 = sbr.rel (%p162) target = $region12
      $region11: #{_ffn_forward.1} parent=5 // pred_region
        %s166 = ssub.s32 %s16, 1
        // Predicated region
        $region13: #{_ffn_forward.1} parent=11 // pred_check
          %p167 = pneg %p63
        $region14: #{_ffn_forward.1} parent=11 // pred_check_branch
          %169 = sbr.rel (%p167) target = $region16
        $region15: #{_ffn_forward.1} parent=11 // pred_region
          %171 = vsyncadd [#allocation3], 0
          %s172 = sshll.u32 %s1, 4
          %s173 = int_to_ptr.hbm [resolvable:$true] %s172
          %s174 = sshll.u32 [#allocation2], 4
          %s175 = int_to_ptr.vmem [resolvable:$true] %s174
          %180 = dma.hbm_to_vmem [thread:$0]  %s173, 2048, %s175, [#allocation3], 128, 128, 8
        $region16: #{_ffn_forward.1} parent=11 // pred_fallthru
          _
        // Predicated region
        $region17: #{_ffn_forward.1} parent=11 // pred_check
          %p181 = pneg %p84
        $region18: #{_ffn_forward.1} parent=11 // pred_check_branch
          %183 = sbr.rel (%p181) target = $region20
        $region19: #{_ffn_forward.1} parent=11 // pred_region
          _
        $region20: #{_ffn_forward.1} parent=11 // pred_fallthru
          _
        // Predicated region
        $region21: #{_ffn_forward.1} parent=11 // pred_check
          %p184 = pneg %p105
        $region22: #{_ffn_forward.1} parent=11 // pred_check_branch
          %186 = sbr.rel (%p184) target = $region24
        $region23: #{_ffn_forward.1} parent=11 // pred_region
          %188 = vsyncadd [#allocation6], 0
          %s189 = sshll.u32 %s3, 4
          %s190 = int_to_ptr.hbm [resolvable:$true] %s189
          %s191 = sshll.u32 [#allocation5], 4
          %s192 = int_to_ptr.vmem [resolvable:$true] %s191
          %197 = dma.hbm_to_vmem [thread:$0]  %s190, 2048, %s192, [#allocation6], 64, 64, 4
        $region24: #{_ffn_forward.1} parent=11 // pred_fallthru
          _
        // Predicated region
        $region25: #{_ffn_forward.1} parent=11 // pred_check
          %p198 = pneg %p126
        $region26: #{_ffn_forward.1} parent=11 // pred_check_branch
          %200 = sbr.rel (%p198) target = $region28
        $region27: #{_ffn_forward.1} parent=11 // pred_region
          _
        $region28: #{_ffn_forward.1} parent=11 // pred_fallthru
          _
      $region12: #{_ffn_forward.1} parent=5 // pred_fallthru
        _
      %p201 = scmp.lt.s32.totalorder %s16, 2
      // Predicated region
      $region29: #{_ffn_forward.1} parent=5 // pred_check
        %p202 = pneg %p201
      $region30: #{_ffn_forward.1} parent=5 // pred_check_branch
        %204 = sbr.rel (%p202) target = $region32
      $region31: #{_ffn_forward.1} parent=5 // pred_region
        // Predicated region
        $region33: #{_ffn_forward.1} parent=31 // pred_check
          %p205 = pneg %p36
        $region34: #{_ffn_forward.1} parent=31 // pred_check_branch
          %207 = sbr.rel (%p205) target = $region36
        $region35: #{_ffn_forward.1} parent=31 // pred_region
          %p208 = scmp.lt.s32.totalorder %s16, 1
          %s209 = scalar_select %p208, %s16, 1
          %s210 = smul.addr %s209, 8
          %s211 = scalar_lea.vmem %s0, %s210
        $region36: #{_ffn_forward.1} parent=31 // pred_fallthru
          _
      $region32: #{_ffn_forward.1} parent=5 // pred_fallthru
        _
      %p212 = scmp.le.s32.totalorder 1, %s16
      %p213 = scmp.lt.s32.totalorder %s16, 3
      %p214 = pnand %p212, %p213
      %p215 = pneg %p214
      // Predicated region
      $region37: #{_ffn_forward.1} parent=5 // pred_check
        _
      $region38: #{_ffn_forward.1} parent=5 // pred_check_branch
        %217 = sbr.rel (%p214) target = $region40
      $region39: #{_ffn_forward.1} parent=5 // pred_region
        %s218 = ssub.s32 %s16, 1
        // Predicated region
        $region41: #{_ffn_forward.1} parent=39 // pred_check
          %p219 = pneg %p63
        $region42: #{_ffn_forward.1} parent=39 // pred_check_branch
          %221 = sbr.rel (%p219) target = $region44
        $region43: #{_ffn_forward.1} parent=39 // pred_region
          %223 = dma.done [#allocation3], 2048
        $region44: #{_ffn_forward.1} parent=39 // pred_fallthru
          _
        // Predicated region
        $region45: #{_ffn_forward.1} parent=39 // pred_check
          %p224 = pneg %p105
        $region46: #{_ffn_forward.1} parent=39 // pred_check_branch
          %226 = sbr.rel (%p224) target = $region48
        $region47: #{_ffn_forward.1} parent=39 // pred_region
          %228 = dma.done [#allocation6], 2048
        $region48: #{_ffn_forward.1} parent=39 // pred_fallthru
          _
        %p229 = scmp.lt.s32.totalorder %s21, 1
        %s230 = scalar_select %p229, %s21, 1
        %s231 = smul.addr %s230, 8
        %s232 = scalar_lea.vmem %s0, %s231
        %p233 = pneg %p42
        %p234 = pneg %p39
        %p235 = pneg %p63
        %p236 = pneg %p60
        %p237 = pneg %p84
        %p238 = pneg %p81
        %p239 = pneg %p105
        %p240 = pneg %p102
        %p241 = pneg %p126
        %p242 = pneg %p123
        %p243 = pneg %p152
        %p244 = pneg %p149
        %s245 = sand.u32 %s139, 1
        %s246 = scalar_lea.sflag [#allocation4], %s245
        %s247 = sand.u32 %s139, 1
        %s248 = smul.addr %s247, 8
        %s249 = scalar_lea.vmem [#allocation7], %s248
        %p250 = scmp.lt.s32.totalorder %s21, 1
        %s251 = scalar_select %p250, %s21, 1
        %s252 = smul.addr %s251, 8
        %s253 = scalar_lea.vmem %s0, %s252
        %v254 = vld [vmem:[#allocation2] sm:$0xff]
        %v255 = vld [vmem:[#allocation2 + $0x8] sm:$0xff]
        %v256 = vld [vmem:[#allocation2 + $0x10] sm:$0xff]
        %v257 = vld [vmem:[#allocation2 + $0x18] sm:$0xff]
        %v258 = vld [vmem:[#allocation2 + $0x20] sm:$0xff]
        %v259 = vld [vmem:[#allocation2 + $0x28] sm:$0xff]
        %v260 = vld [vmem:[#allocation2 + $0x30] sm:$0xff]
        %v261 = vld [vmem:[#allocation2 + $0x38] sm:$0xff]
        %v262 = vld [vmem:[#allocation2 + $0x40] sm:$0xff]
        %v263 = vld [vmem:[#allocation2 + $0x48] sm:$0xff]
        %v264 = vld [vmem:[#allocation2 + $0x50] sm:$0xff]
        %v265 = vld [vmem:[#allocation2 + $0x58] sm:$0xff]
        %v266 = vld [vmem:[#allocation2 + $0x60] sm:$0xff]
        %v267 = vld [vmem:[#allocation2 + $0x68] sm:$0xff]
        %v268 = vld [vmem:[#allocation2 + $0x70] sm:$0xff]
        %v269 = vld [vmem:[#allocation2 + $0x78] sm:$0xff]
        %v270 = vld [vmem:[%s253] sm:$0xff]
        %v271 = vpack.c.bf16 %v270, %v270
        %v272 = vld [vmem:[%s2] sm:$0x3]
        %v274 = vperm.slane %v272, 0
        %v275 = vperm.slane %v272, 1
        %v294 = vunpack.c.l.b16 %v254
        %v295 = vunpack.c.h.b16 %v254
        %v296 = vunpack.c.l.b16 %v255
        %v297 = vunpack.c.h.b16 %v255
        %v298 = vunpack.c.l.b16 %v256
        %v299 = vunpack.c.h.b16 %v256
        %v300 = vunpack.c.l.b16 %v257
        %v301 = vunpack.c.h.b16 %v257
        %v302 = vunpack.c.l.b16 %v258
        %v303 = vunpack.c.h.b16 %v258
        %v304 = vunpack.c.l.b16 %v259
        %v305 = vunpack.c.h.b16 %v259
        %v306 = vunpack.c.l.b16 %v260
        %v307 = vunpack.c.h.b16 %v260
        %v308 = vunpack.c.l.b16 %v261
        %v309 = vunpack.c.h.b16 %v261
        %v310 = vunpack.c.l.b16 %v262
        %v311 = vunpack.c.h.b16 %v262
        %v312 = vunpack.c.l.b16 %v263
        %v313 = vunpack.c.h.b16 %v263
        %v314 = vunpack.c.l.b16 %v264
        %v315 = vunpack.c.h.b16 %v264
        %v316 = vunpack.c.l.b16 %v265
        %v317 = vunpack.c.h.b16 %v265
        %v318 = vunpack.c.l.b16 %v266
        %v319 = vunpack.c.h.b16 %v266
        %v320 = vunpack.c.l.b16 %v267
        %v321 = vunpack.c.h.b16 %v267
        %v322 = vunpack.c.l.b16 %v268
        %v323 = vunpack.c.h.b16 %v268
        %v324 = vunpack.c.l.b16 %v269
        %v325 = vunpack.c.h.b16 %v269
        %v326 = vpack.c.b16 %v296, %v294
        %v327 = vpack.c.b16 %v297, %v295
        %v328 = vpack.c.b16 %v300, %v298
        %v329 = vpack.c.b16 %v301, %v299
        %v330 = vpack.c.b16 %v304, %v302
        %v331 = vpack.c.b16 %v305, %v303
        %v332 = vpack.c.b16 %v308, %v306
        %v333 = vpack.c.b16 %v309, %v307
        %v334 = vpack.c.b16 %v312, %v310
        %v335 = vpack.c.b16 %v313, %v311
        %v336 = vpack.c.b16 %v316, %v314
        %v337 = vpack.c.b16 %v317, %v315
        %v338 = vpack.c.b16 %v320, %v318
        %v339 = vpack.c.b16 %v321, %v319
        %v340 = vpack.c.b16 %v324, %v322
        %v341 = vpack.c.b16 %v325, %v323
        %358 = vmatpush.bf16.msra.mxu0 %v340
        %359 = vmatpush.bf16.msra.mxu0 %v338
        %360 = vmatpush.bf16.msra.mxu0 %v336
        %361 = vmatpush.bf16.msra.mxu0 %v334
        %362 = vmatpush.bf16.msra.mxu0 %v332
        %363 = vmatpush.bf16.msra.mxu0 %v330
        %364 = vmatpush.bf16.msra.mxu0 %v328
        %365 = vmatpush.bf16.msra.mxu0 %v326
        %366 = vmatmul.bf16.gmra.mxu0 %v271
        %v367 = vpop.f32.mrf.mxu0
        %v368 = vadd.f32 %v274, %v367
        %v369 = vpop.f32.mrf.mxu0
        %370 = vdwg.mxu0
        %371 = vmatpush.bf16.msra.mxu0 %v341
        %372 = vmatpush.bf16.msra.mxu0 %v339
        %373 = vmatpush.bf16.msra.mxu0 %v337
        %374 = vmatpush.bf16.msra.mxu0 %v335
        %375 = vmatpush.bf16.msra.mxu0 %v333
        %376 = vmatpush.bf16.msra.mxu0 %v331
        %377 = vmatpush.bf16.msra.mxu0 %v329
        %378 = vmatpush.bf16.msra.mxu0 %v327
        %379 = vmatmul.bf16.gmra.mxu0 %v271
        %v380 = vpop.f32.mrf.mxu0
        %v381 = vadd.f32 %v275, %v380
        %v382 = vpop.f32.mrf.mxu0
        %383 = vdwg.mxu0
        %v384 = vmax.f32 %v368, 0.0
        %v385 = vmax.f32 %v381, 0.0
        %v386 = vld [vmem:[#allocation5] sm:$0xf]
        %v387 = vld [vmem:[#allocation5 + $0x4] sm:$0xf]
        %v388 = vld [vmem:[#allocation5 + $0x8] sm:$0xf]
        %v389 = vld [vmem:[#allocation5 + $0xc] sm:$0xf]
        %v390 = vld [vmem:[#allocation5 + $0x10] sm:$0xf]
        %v391 = vld [vmem:[#allocation5 + $0x14] sm:$0xf]
        %v392 = vld [vmem:[#allocation5 + $0x18] sm:$0xf]
        %v393 = vld [vmem:[#allocation5 + $0x1c] sm:$0xf]
        %v394 = vld [vmem:[#allocation5 + $0x20] sm:$0xf]
        %v395 = vld [vmem:[#allocation5 + $0x24] sm:$0xf]
        %v396 = vld [vmem:[#allocation5 + $0x28] sm:$0xf]
        %v397 = vld [vmem:[#allocation5 + $0x2c] sm:$0xf]
        %v398 = vld [vmem:[#allocation5 + $0x30] sm:$0xf]
        %v399 = vld [vmem:[#allocation5 + $0x34] sm:$0xf]
        %v400 = vld [vmem:[#allocation5 + $0x38] sm:$0xf]
        %v401 = vld [vmem:[#allocation5 + $0x3c] sm:$0xf]
        %v402 = vld [vmem:[#allocation5 + $0x40] sm:$0xf]
        %v403 = vld [vmem:[#allocation5 + $0x44] sm:$0xf]
        %v404 = vld [vmem:[#allocation5 + $0x48] sm:$0xf]
        %v405 = vld [vmem:[#allocation5 + $0x4c] sm:$0xf]
        %v406 = vld [vmem:[#allocation5 + $0x50] sm:$0xf]
        %v407 = vld [vmem:[#allocation5 + $0x54] sm:$0xf]
        %v408 = vld [vmem:[#allocation5 + $0x58] sm:$0xf]
        %v409 = vld [vmem:[#allocation5 + $0x5c] sm:$0xf]
        %v410 = vld [vmem:[#allocation5 + $0x60] sm:$0xf]
        %v411 = vld [vmem:[#allocation5 + $0x64] sm:$0xf]
        %v412 = vld [vmem:[#allocation5 + $0x68] sm:$0xf]
        %v413 = vld [vmem:[#allocation5 + $0x6c] sm:$0xf]
        %v414 = vld [vmem:[#allocation5 + $0x70] sm:$0xf]
        %v415 = vld [vmem:[#allocation5 + $0x74] sm:$0xf]
        %v416 = vld [vmem:[#allocation5 + $0x78] sm:$0xf]
        %v417 = vld [vmem:[#allocation5 + $0x7c] sm:$0xf]
        %v418 = vpack.c.bf16 %v384, %v384
        %v419 = vpack.c.bf16 %v385, %v385
        %v420 = vld [vmem:[%s4] sm:$0x1]
        %v422 = vperm.slane %v420, 0
        %v456 = vunpack.c.l.b16 %v386
        %v457 = vunpack.c.l.b16 %v387
        %v458 = vunpack.c.l.b16 %v388
        %v459 = vunpack.c.l.b16 %v389
        %v460 = vunpack.c.l.b16 %v390
        %v461 = vunpack.c.l.b16 %v391
        %v462 = vunpack.c.l.b16 %v392
        %v463 = vunpack.c.l.b16 %v393
        %v464 = vunpack.c.l.b16 %v394
        %v465 = vunpack.c.l.b16 %v395
        %v466 = vunpack.c.l.b16 %v396
        %v467 = vunpack.c.l.b16 %v397
        %v468 = vunpack.c.l.b16 %v398
        %v469 = vunpack.c.l.b16 %v399
        %v470 = vunpack.c.l.b16 %v400
        %v471 = vunpack.c.l.b16 %v401
        %v472 = vunpack.c.l.b16 %v402
        %v473 = vunpack.c.l.b16 %v403
        %v474 = vunpack.c.l.b16 %v404
        %v475 = vunpack.c.l.b16 %v405
        %v476 = vunpack.c.l.b16 %v406
        %v477 = vunpack.c.l.b16 %v407
        %v478 = vunpack.c.l.b16 %v408
        %v479 = vunpack.c.l.b16 %v409
        %v480 = vunpack.c.l.b16 %v410
        %v481 = vunpack.c.l.b16 %v411
        %v482 = vunpack.c.l.b16 %v412
        %v483 = vunpack.c.l.b16 %v413
        %v484 = vunpack.c.l.b16 %v414
        %v485 = vunpack.c.l.b16 %v415
        %v486 = vunpack.c.l.b16 %v416
        %v487 = vunpack.c.l.b16 %v417
        %v488 = vpack.c.b16 %v457, %v456
        %v489 = vpack.c.b16 %v459, %v458
        %v490 = vpack.c.b16 %v461, %v460
        %v491 = vpack.c.b16 %v463, %v462
        %v492 = vpack.c.b16 %v465, %v464
        %v493 = vpack.c.b16 %v467, %v466
        %v494 = vpack.c.b16 %v469, %v468
        %v495 = vpack.c.b16 %v471, %v470
        %v496 = vpack.c.b16 %v473, %v472
        %v497 = vpack.c.b16 %v475, %v474
        %v498 = vpack.c.b16 %v477, %v476
        %v499 = vpack.c.b16 %v479, %v478
        %v500 = vpack.c.b16 %v481, %v480
        %v501 = vpack.c.b16 %v483, %v482
        %v502 = vpack.c.b16 %v485, %v484
        %v503 = vpack.c.b16 %v487, %v486
        %520 = vmatpush.bf16.msra.mxu0 %v495
        %521 = vmatpush.bf16.msra.mxu0 %v494
        %522 = vmatpush.bf16.msra.mxu0 %v493
        %523 = vmatpush.bf16.msra.mxu0 %v492
        %524 = vmatpush.bf16.msra.mxu0 %v491
        %525 = vmatpush.bf16.msra.mxu0 %v490
        %526 = vmatpush.bf16.msra.mxu0 %v489
        %527 = vmatpush.bf16.msra.mxu0 %v488
        %528 = vmatmul.bf16.gmra.mxu0 %v418
        %v529 = vpop.f32.mrf.mxu0
        %v530 = vadd.f32 %v422, %v529
        %v531 = vpop.f32.mrf.mxu0
        %532 = vdwg.mxu0
        %533 = vmatpush.bf16.msra.mxu0 %v503
        %534 = vmatpush.bf16.msra.mxu0 %v502
        %535 = vmatpush.bf16.msra.mxu0 %v501
        %536 = vmatpush.bf16.msra.mxu0 %v500
        %537 = vmatpush.bf16.msra.mxu0 %v499
        %538 = vmatpush.bf16.msra.mxu0 %v498
        %539 = vmatpush.bf16.msra.mxu0 %v497
        %540 = vmatpush.bf16.msra.mxu0 %v496
        %541 = vmatmul.bf16.gmra.mxu0 %v419
        %v542 = vpop.f32.mrf.mxu0
        %v543 = vadd.f32 %v530, %v542
        %v544 = vpop.f32.mrf.mxu0
        %545 = vdwg.mxu0
        %546 = vst [vmem:[%s249] sm:$0xff] %v543
        %s547 = sand.u32 %s139, 1
        %s548 = scalar_lea.sflag [#allocation4], %s547
        %s549 = sand.u32 %s139, 1
        %s550 = smul.addr %s549, 8
        %s551 = scalar_lea.vmem [#allocation7], %s550
        // Predicated region
        $region49: #{_ffn_forward.1} parent=39 // pred_check
          %p552 = pneg %p149
        $region50: #{_ffn_forward.1} parent=39 // pred_check_branch
          %554 = sbr.rel (%p552) target = $region52
        $region51: #{_ffn_forward.1} parent=39 // pred_region
          %556 = vsyncadd %s548, 0
          %s557 = smul.addr %s21, 8
          %s558 = scalar_lea.hbm %s5, %s557
          %s560 = sshll.u32 %s551, 4
          %s561 = int_to_ptr.vmem [resolvable:$true] %s560
          %s562 = sshll.u32 %s558, 4
          %s563 = int_to_ptr.hbm [resolvable:$true] %s562
          %565 = dma.vmem_to_hbm [thread:$0]  %s561, 128, %s563, %s548
        $region52: #{_ffn_forward.1} parent=39 // pred_fallthru
          _
      $region40: #{_ffn_forward.1} parent=5 // pred_fallthru
        _
      %p566 = scmp.le.s32.totalorder 2, %s16
      // Predicated region
      $region53: #{_ffn_forward.1} parent=5 // pred_check
        %p567 = pneg %p566
      $region54: #{_ffn_forward.1} parent=5 // pred_check_branch
        %569 = sbr.rel (%p567) target = $region56
      $region55: #{_ffn_forward.1} parent=5 // pred_region
        %s570 = ssub.s32 %s16, 2
        // Predicated region
        $region57: #{_ffn_forward.1} parent=55 // pred_check
          %p571 = pneg %p155
        $region58: #{_ffn_forward.1} parent=55 // pred_check_branch
          %573 = sbr.rel (%p571) target = $region60
        $region59: #{_ffn_forward.1} parent=55 // pred_region
          %s574 = sand.u32 %s140, 1
          %s575 = scalar_lea.sflag [#allocation4], %s574
          %s576 = sand.u32 %s140, 1
          %s577 = smul.addr %s576, 8
          %s578 = scalar_lea.vmem [#allocation7], %s577
          %580 = dma.done %s575, 128
        $region60: #{_ffn_forward.1} parent=55 // pred_fallthru
          _
      $region56: #{_ffn_forward.1} parent=5 // pred_fallthru
        _
    $region6: #{_ffn_forward.1} parent=1 // loop_footer
      %s20 = sadd.s32 1, %s16
    $region7: #{_ffn_forward.1} parent=1 // loop_footer_branch
      %15 = sbr.rel target = $region3
    $region8: #{_ffn_forward.1} parent=1 // loop_exit
      _
    %581 = vsyncpa [#allocation3], 1
    %s582 = scalar_lea.sflag [#allocation3], 1
    %583 = vsyncpa %s582, 1
    %584 = vsyncpa [#allocation6], 1
    %585 = vsyncpa [#allocation4], 1
    %s586 = scalar_lea.sflag [#allocation4], 1
    %587 = vsyncpa %s586, 1

</llo_original>
